<compile_context>
chip_gen: v6e
topology: v6e:2x2x1
jax: 0.10.0
libtpu: 0.0.40
codegen_flags: <defaults>
</compile_context>

<pallas_src>
import math
from functools import partial

import jax
import jax.numpy as jnp
from jax import lax
from jax.experimental import pallas as pl
from jax.experimental.pallas import tpu as pltpu


def _pick_tile(dim, target, align):
    """Largest multiple of `align` that divides `dim` and is <= target; else the
    full dim (a full-extent block is always layout-legal)."""
    if dim <= target:
        return dim
    t = (target // align) * align
    while t >= align:
        if dim % t == 0:
            return t
        t -= align
    return dim


# ---------------------------------------------------------------------------
# Tiled linear:  y = act(x @ W + b)     (W passed pre-transposed: (d_in, d_out))
# ---------------------------------------------------------------------------
def _linear_kernel(x_ref, w_ref, b_ref, o_ref, acc_ref, *, activation, mxu_dtype):
    @pl.when(pl.program_id(2) == 0)
    def _():
        acc_ref[...] = jnp.zeros_like(acc_ref)

    acc_ref[...] += jnp.dot(x_ref[...].astype(mxu_dtype),
                            w_ref[...].astype(mxu_dtype),
                            preferred_element_type=jnp.float32)

    @pl.when(pl.program_id(2) == pl.num_programs(2) - 1)
    def _():
        y = acc_ref[...] + b_ref[...].astype(jnp.float32)
        if activation == "relu":
            y = jnp.maximum(y, 0.0)
        o_ref[...] = y.astype(o_ref.dtype)


def linear(x2d, w_t, b, activation=None, *, mxu_dtype=jnp.bfloat16):
    n, d_in = x2d.shape
    d_out = w_t.shape[1]
    tm = _pick_tile(n, 256, 8)
    tn = _pick_tile(d_out, 256, 128)
    tk = _pick_tile(d_in, 512, 128)
    grid = (n // tm, d_out // tn, d_in // tk)
    cost = pl.CostEstimate(
        flops=2 * n * d_in * d_out, transcendentals=0,
        bytes_accessed=4 * (n * d_in + d_in * d_out + d_out + n * d_out))
    return pl.pallas_call(
        partial(_linear_kernel, activation=activation, mxu_dtype=mxu_dtype),
        out_shape=jax.ShapeDtypeStruct((n, d_out), x2d.dtype),
        grid=grid,
        in_specs=[
            pl.BlockSpec((tm, tk), lambda i, j, k: (i, k)),
            pl.BlockSpec((tk, tn), lambda i, j, k: (k, j)),
            pl.BlockSpec((1, tn), lambda i, j, k: (0, j)),
        ],
        out_specs=pl.BlockSpec((tm, tn), lambda i, j, k: (i, j)),
        scratch_shapes=[pltpu.VMEM((tm, tn), jnp.float32)],
        compiler_params=pltpu.CompilerParams(
            dimension_semantics=("parallel", "parallel", "arbitrary")),
        cost_estimate=cost,
    )(x2d, w_t, b.reshape(1, d_out))


# ---------------------------------------------------------------------------
# Fused linear + residual + LayerNorm:  LN(res + x @ W + b)   (single N block)
# ---------------------------------------------------------------------------
def _linear_res_ln_kernel(x_ref, w_ref, b_ref, r_ref, g_ref, bt_ref, o_ref,
                          acc_ref, *, eps, mxu_dtype):
    k = pl.program_id(1)

    @pl.when(k == 0)
    def _():
        acc_ref[...] = jnp.zeros_like(acc_ref)

    acc_ref[...] += jnp.dot(x_ref[...].astype(mxu_dtype),
                            w_ref[...].astype(mxu_dtype),
                            preferred_element_type=jnp.float32)

    @pl.when(k == pl.num_programs(1) - 1)
    def _():
        y = (acc_ref[...] + b_ref[...].astype(jnp.float32)
             + r_ref[...].astype(jnp.float32))
        mu = jnp.mean(y, axis=-1, keepdims=True)
        var = jnp.mean(jnp.square(y - mu), axis=-1, keepdims=True)
        y = (y - mu) * lax.rsqrt(var + eps)
        o_ref[...] = (y * g_ref[...].astype(jnp.float32)
                      + bt_ref[...].astype(jnp.float32)).astype(o_ref.dtype)


def linear_residual_layernorm(x2d, w_t, b, res2d, gamma, beta, *,
                              eps=1e-5, mxu_dtype=jnp.bfloat16):
    n, d_in = x2d.shape
    d_out = w_t.shape[1]
    tm = _pick_tile(n, 256, 8)
    tk = _pick_tile(d_in, 512, 128)
    grid = (n // tm, d_in // tk)
    cost = pl.CostEstimate(
        flops=2 * n * d_in * d_out + 8 * n * d_out, transcendentals=0,
        bytes_accessed=4 * (n * d_in + d_in * d_out + 3 * d_out + 2 * n * d_out))
    return pl.pallas_call(
        partial(_linear_res_ln_kernel, eps=eps, mxu_dtype=mxu_dtype),
        out_shape=jax.ShapeDtypeStruct((n, d_out), x2d.dtype),
        grid=grid,
        in_specs=[
            pl.BlockSpec((tm, tk), lambda i, k: (i, k)),
            pl.BlockSpec((tk, d_out), lambda i, k: (k, 0)),
            pl.BlockSpec((1, d_out), lambda i, k: (0, 0)),
            pl.BlockSpec((tm, d_out), lambda i, k: (i, 0)),
            pl.BlockSpec((1, d_out), lambda i, k: (0, 0)),
            pl.BlockSpec((1, d_out), lambda i, k: (0, 0)),
        ],
        out_specs=pl.BlockSpec((tm, d_out), lambda i, k: (i, 0)),
        scratch_shapes=[pltpu.VMEM((tm, d_out), jnp.float32)],
        compiler_params=pltpu.CompilerParams(
            dimension_semantics=("parallel", "arbitrary")),
        cost_estimate=cost,
    )(x2d, w_t, b.reshape(1, d_out), res2d,
      gamma.reshape(1, d_out), beta.reshape(1, d_out))


# ---------------------------------------------------------------------------
# Flash-style multi-head attention (online softmax, all heads per block,
# Q/K/V read directly from fused projection buffers via column-block offsets)
# ---------------------------------------------------------------------------
def _mha_kernel(*refs, num_heads, d_head, tq, tk, causal, mask_heads, mxu_dtype):
    have_mask = mask_heads > 0
    if have_mask:
        q_ref, k_ref, v_ref, mask_ref, o_ref, m_ref, l_ref, acc_ref = refs
    else:
        q_ref, k_ref, v_ref, o_ref, m_ref, l_ref, acc_ref = refs

    qi = pl.program_id(1)
    ki = pl.program_id(2)

    @pl.when(ki == 0)
    def _():
        m_ref[...] = jnp.full(m_ref.shape, -jnp.inf, jnp.float32)
        l_ref[...] = jnp.zeros_like(l_ref)
        acc_ref[...] = jnp.zeros_like(acc_ref)

    def update():
        q = q_ref[0]                                   # (tq, D)  (scale pre-folded into Wq)
        kk = k_ref[0]                                  # (tk, D)
        vv = v_ref[0]                                  # (tk, D)
        if causal:
            row = lax.broadcasted_iota(jnp.int32, (tq, tk), 0) + qi * tq
            col = lax.broadcasted_iota(jnp.int32, (tq, tk), 1) + ki * tk
            allow = col <= row
        if have_mask:
            mvals = mask_ref[0].astype(jnp.int32)      # (mask_heads, tq, tk)
        for h in range(num_heads):
            sl = slice(h * d_head, (h + 1) * d_head)
            # NOTE: for d_head < 128 these lane slices force an in-VMEM relayout;
            # they never touch HBM (that is the point of avoiding the transpose).
            s = lax.dot_general(q[:, sl].astype(mxu_dtype),
                                kk[:, sl].astype(mxu_dtype),
                                (((1,), (1,)), ((), ())),
                                preferred_element_type=jnp.float32)   # (tq, tk)
            if causal:
                s = jnp.where(allow, s, -1e9)
            if have_mask:
                mh = mvals[h] if mask_heads > 1 else mvals[0]
                s = jnp.where(mh != 0, s, -1e9)        # torch masked_fill(mask==0, -1e9)
            m_prev = m_ref[h]
            m_new = jnp.maximum(m_prev, s.max(axis=-1, keepdims=True))
            alpha = jnp.exp(m_prev - m_new)
            p = jnp.exp(s - m_new)
            l_ref[h] = alpha * l_ref[h] + p.sum(axis=-1, keepdims=True)
            acc_ref[h] = alpha * acc_ref[h] + jnp.dot(
                p.astype(mxu_dtype), vv[:, sl].astype(mxu_dtype),
                preferred_element_type=jnp.float32)
            m_ref[h] = m_new

    if causal:
        # Skip KV tiles that lie entirely above the diagonal for this q tile.
        @pl.when(ki * tk <= qi * tq + (tq - 1))
        def _():
            update()
    else:
        update()

    @pl.when(ki == pl.num_programs(2) - 1)
    def _():
        outs = [acc_ref[h] * (1.0 / l_ref[h]) for h in range(num_heads)]
        o_ref[0] = jnp.concatenate(outs, axis=-1).astype(o_ref.dtype)


def flash_mha(q_arr, kv_arr, *, num_heads, d_model, q_col, k_col, v_col,
              mask=None, causal=False, mxu_dtype=jnp.bfloat16):
    """Multi-head attention over fused projection buffers.

    q_arr : (B, Sq, Wq)  -- query columns live at block q_col (width d_model)
    kv_arr: (B, Sk, Wkv) -- key / value columns live at blocks k_col / v_col
    Returns (B, Sq, d_model), heads interleaved (free reshape to (B*Sq, D)).
    """
    B, Sq, _ = q_arr.shape
    Sk = kv_arr.shape[1]
    D = d_model
    H = num_heads
    dk = D // H

    if D % 128 != 0:
        # Fallback for lane-unaligned d_model: materialize contiguous Q/K/V
        # slices (one extra HBM copy each) so block last dims stay layout-legal.
        q_sl = lax.slice_in_dim(q_arr, q_col * D, (q_col + 1) * D, axis=2)
        k_arr = lax.slice_in_dim(kv_arr, k_col * D, (k_col + 1) * D, axis=2)
        v_arr = lax.slice_in_dim(kv_arr, v_col * D, (v_col + 1) * D, axis=2)
        q_arr = q_sl
        q_col = k_col = v_col = 0
    else:
        k_arr = v_arr = kv_arr

    tq = _pick_tile(Sq, 256, 8)
    # With an explicit mask the mask block's last dim is tk -> keep it 128-aligned
    # (or the full Sk); without a mask sublane alignment (8) is enough.
    tk = _pick_tile(Sk, 512, 8) if mask is None else _pick_tile(Sk, 512, 128)
    grid = (B, Sq // tq, Sk // tk)

    qc, kc, vc = q_col, k_col, v_col
    in_specs = [
        pl.BlockSpec((1, tq, D), lambda b, i, j: (b, i, qc)),
        pl.BlockSpec((1, tk, D), lambda b, i, j: (b, j, kc)),
        pl.BlockSpec((1, tk, D), lambda b, i, j: (b, j, vc)),
    ]
    args = [q_arr, k_arr, v_arr]

    mask_heads = 0
    if mask is not None:
        m = jnp.asarray(mask)
        if m.ndim == 2:
            m = m[None, None]            # (Sq, Sk)     -> (1, 1, Sq, Sk)
        elif m.ndim == 3:
            m = m[:, None]               # (B, Sq, Sk)  -> (B, 1, Sq, Sk)
        Bm, Hm = int(m.shape[0]), int(m.shape[1])
        mask_heads = Hm
        m = m.astype(jnp.int8)           # compact: no batch/head broadcast in HBM
        if Bm > 1:
            in_specs.append(pl.BlockSpec((1, Hm, tq, tk), lambda b, i, j: (b, 0, i, j)))
        else:
            in_specs.append(pl.BlockSpec((1, Hm, tq, tk), lambda b, i, j: (0, 0, i, j)))
        args.append(m)

    cost = pl.CostEstimate(
        flops=4 * B * H * Sq * Sk * dk,
        transcendentals=B * H * Sq * Sk,
        bytes_accessed=4 * (2 * B * Sq * D + 2 * B * Sk * D))

    return pl.pallas_call(
        partial(_mha_kernel, num_heads=H, d_head=dk, tq=tq, tk=tk,
                causal=causal, mask_heads=mask_heads, mxu_dtype=mxu_dtype),
        out_shape=jax.ShapeDtypeStruct((B, Sq, D), q_arr.dtype),
        grid=grid,
        in_specs=in_specs,
        out_specs=pl.BlockSpec((1, tq, D), lambda b, i, j: (b, i, 0)),
        scratch_shapes=[
            pltpu.VMEM((H, tq, 1), jnp.float32),    # running max
            pltpu.VMEM((H, tq, 1), jnp.float32),    # running denom
            pltpu.VMEM((H, tq, dk), jnp.float32),   # output accumulator
        ],
        compiler_params=pltpu.CompilerParams(
            dimension_semantics=("parallel", "parallel", "arbitrary")),
        cost_estimate=cost,
    )(*args)


# ---------------------------------------------------------------------------
# One-time parameter preparation (runs once, outside the per-forward hot path)
# ---------------------------------------------------------------------------
def prepare_params(raw):
    """Pre-transpose / pre-fuse weights and fold 1/sqrt(dk) into Wq / bq."""
    sa, ca, ff = raw["self_attn"], raw["src_attn"], raw["ff"]
    H = sa["num_heads"]
    D = sa["wq"].shape[0]
    scale = 1.0 / math.sqrt(D // H)
    return {
        "num_heads": H,
        "self_attn": {
            "w_qkv_t": jnp.concatenate(
                [sa["wq"] * scale, sa["wk"], sa["wv"]], axis=0).T,   # (D, 3D)
            "b_qkv": jnp.concatenate([sa["bq"] * scale, sa["bk"], sa["bv"]]),
            "wo_t": sa["wo"].T, "bo": sa["bo"],
        },
        "src_attn": {
            "wq_t": (ca["wq"] * scale).T, "bq": ca["bq"] * scale,
            "w_kv_t": jnp.concatenate([ca["wk"], ca["wv"]], axis=0).T,  # (D, 2D)
            "b_kv": jnp.concatenate([ca["bk"], ca["bv"]]),
            "wo_t": ca["wo"].T, "bo": ca["bo"],
        },
        "ff": {"w1_t": ff["w1"].T, "b1": ff["b1"],
               "w2_t": ff["w2"].T, "b2": ff["b2"]},
        "norm1": dict(raw["norm1"]),
        "norm2": dict(raw["norm2"]),
        "norm3": dict(raw["norm3"]),
    }


# ---------------------------------------------------------------------------
# DecoderLayer forward (eval mode)
# ---------------------------------------------------------------------------
def decoder_layer(p, tgt, memory, tgt_mask=None, src_mask=None, *,
                  tgt_is_causal=False, src_is_causal=False,
                  mxu_dtype=jnp.bfloat16):
    """`p` must come from prepare_params()."""
    B, St, D = tgt.shape
    Sm = memory.shape[1]
    H = p["num_heads"]
    tgt2 = tgt.reshape(B * St, D)
    mem2 = memory.reshape(B * Sm, D)

    # ---- self-attention + add&norm (LN fused into the Wo matmul epilogue) ----
    sa = p["self_attn"]
    qkv = linear(tgt2, sa["w_qkv_t"], sa["b_qkv"], mxu_dtype=mxu_dtype)   # (B*St, 3D)
    qkv = qkv.reshape(B, St, 3 * D)                                        # free reshape
    attn = flash_mha(qkv, qkv, num_heads=H, d_model=D,
                     q_col=0, k_col=1, v_col=2,
                     mask=None if tgt_is_causal else tgt_mask,
                     causal=tgt_is_causal, mxu_dtype=mxu_dtype)            # (B, St, D)
    x = linear_residual_layernorm(attn.reshape(B * St, D), sa["wo_t"], sa["bo"],
                                  tgt2, p["norm1"]["gamma"], p["norm1"]["beta"],
                                  mxu_dtype=mxu_dtype)

    # ---- cross-attention + add&norm ----
    ca = p["src_attn"]
    q = linear(x, ca["wq_t"], ca["bq"], mxu_dtype=mxu_dtype)               # (B*St, D)
    kv = linear(mem2, ca["w_kv_t"], ca["b_kv"], mxu_dtype=mxu_dtype)       # (B*Sm, 2D)
    attn = flash_mha(q.reshape(B, St, D), kv.reshape(B, Sm, 2 * D),
                     num_heads=H, d_model=D, q_col=0, k_col=0, v_col=1,
                     mask=None if src_is_causal else src_mask,
                     causal=src_is_causal, mxu_dtype=mxu_dtype)
    x = linear_residual_layernorm(attn.reshape(B * St, D), ca["wo_t"], ca["bo"],
                                  x, p["norm2"]["gamma"], p["norm2"]["beta"],
                                  mxu_dtype=mxu_dtype)

    # ---- feed-forward + add&norm ----
    ff = p["ff"]
    h = linear(x, ff["w1_t"], ff["b1"], activation="relu", mxu_dtype=mxu_dtype)
    x = linear_residual_layernorm(h, ff["w2_t"], ff["b2"],
                                  x, p["norm3"]["gamma"], p["norm3"]["beta"],
                                  mxu_dtype=mxu_dtype)
    # TODO(synk): training-mode dropout (dropout1/2/3 + FFN dropout) would need
    # pltpu.prng_random_bits masking fused into these epilogues.
    return x.reshape(B, St, D)


# ---------------------------------------------------------------------------
# Plain-JAX reference (for correctness checks), operating on the raw params
# ---------------------------------------------------------------------------
def _ref_linear(x, w, b):
    return x @ w.T + b


def _ref_mha(p, q_in, k_in, v_in, mask):
    B, Sq, D = q_in.shape
    H = p["num_heads"]
    dk = D // H

    def proj(x, w, b):
        return _ref_linear(x, w, b).reshape(B, x.shape[1], H, dk).transpose(0, 2, 1, 3)

    q = proj(q_in, p["wq"], p["bq"])
    k = proj(k_in, p["wk"], p["bk"])
    v = proj(v_in, p["wv"], p["bv"])
    s = jnp.einsum("bhqd,bhkd->bhqk", q, k) / math.sqrt(dk)
    if mask is not None:
        s = jnp.where(mask == 0, -1e9, s)
    a = jax.nn.softmax(s, axis=-1)
    o = jnp.einsum("bhqk,bhkd->bhqd", a, v)
    o = o.transpose(0, 2, 1, 3).reshape(B, Sq, D)
    return _ref_linear(o, p["wo"], p["bo"])


def _ref_layer_norm(x, g, b, eps=1e-5):
    mu = x.mean(-1, keepdims=True)
    var = ((x - mu) ** 2).mean(-1, keepdims=True)
    return (x - mu) / jnp.sqrt(var + eps) * g + b


def reference_decoder_layer(params, tgt, memory, tgt_mask, src_mask):
    x = _ref_layer_norm(
        tgt + _ref_mha(params["self_attn"], tgt, tgt, tgt, tgt_mask),
        params["norm1"]["gamma"], params["norm1"]["beta"])
    x = _ref_layer_norm(
        x + _ref_mha(params["src_attn"], x, memory, memory, src_mask),
        params["norm2"]["gamma"], params["norm2"]["beta"])
    ff = _ref_linear(
        jnp.maximum(_ref_linear(x, params["ff"]["w1"], params["ff"]["b1"]), 0.0),
        params["ff"]["w2"], params["ff"]["b2"])
    x = _ref_layer_norm(x + ff, params["norm3"]["gamma"], params["norm3"]["beta"])
    return x


if __name__ == "__main__":
    B, S_TGT, S_MEM, D, H, D_FF = 2, 16, 16, 128, 4, 256

    root = jax.random.PRNGKey(0)
    keys = iter(jax.random.split(root, 32))

    def u(shape, fan_in):
        bound = 1.0 / math.sqrt(fan_in)
        return jax.random.uniform(next(keys), shape, jnp.float32, -bound, bound)

    def attn_params():
        return {"num_heads": H,
                "wq": u((D, D), D), "bq": u((D,), D),
                "wk": u((D, D), D), "bk": u((D,), D),
                "wv": u((D, D), D), "bv": u((D,), D),
                "wo": u((D, D), D), "bo": u((D,), D)}

    def norm_params():
        return {"gamma": 1.0 + 0.1 * jax.random.normal(next(keys), (D,), jnp.float32),
                "beta": 0.1 * jax.random.normal(next(keys), (D,), jnp.float32)}

    raw_params = {
        "self_attn": attn_params(),
        "src_attn": attn_params(),
        "ff": {"w1": u((D_FF, D), D), "b1": u((D_FF,), D),
               "w2": u((D, D_FF), D_FF), "b2": u((D,), D_FF)},
        "norm1": norm_params(), "norm2": norm_params(), "norm3": norm_params(),
    }
    params = prepare_params(raw_params)    # one-time weight prep, off the hot path

    tgt = jax.random.normal(next(keys), (B, S_TGT, D), jnp.float32)
    memory = jax.random.normal(next(keys), (B, S_MEM, D), jnp.float32)
    # causal target mask (1 = keep, 0 = masked); full attention over memory
    tgt_mask = jnp.tril(jnp.ones((S_TGT, S_TGT), jnp.float32)).reshape(
        1, 1, S_TGT, S_TGT)
    src_mask = None

    ref = reference_decoder_layer(raw_params, tgt, memory, tgt_mask, src_mask)

    # 1) f32 MXU operands, causal mask generated in-kernel (no mask DMA at all)
    out = decoder_layer(params, tgt, memory, None, src_mask,
                        tgt_is_causal=True, mxu_dtype=jnp.float32)
    out = jax.block_until_ready(out)
    assert out.shape == (B, S_TGT, D)
    assert jnp.allclose(out, ref, atol=2e-3, rtol=2e-3), float(
        jnp.max(jnp.abs(out - ref)))

    # 2) f32 MXU operands, explicit (1,1,Sq,Sk) mask streamed compactly as int8
    out_m = decoder_layer(params, tgt, memory, tgt_mask, src_mask,
                          tgt_is_causal=False, mxu_dtype=jnp.float32)
    out_m = jax.block_until_ready(out_m)
    assert jnp.allclose(out_m, ref, atol=2e-3, rtol=2e-3), float(
        jnp.max(jnp.abs(out_m - ref)))

    # 3) bf16 MXU operands with f32 accumulation (v6e/v7x throughput mode);
    #    relaxed tolerance vs the f32 reference.
    out_bf = decoder_layer(params, tgt, memory, None, src_mask,
                           tgt_is_causal=True, mxu_dtype=jnp.bfloat16)
    out_bf = jax.block_until_ready(out_bf)
    assert jnp.allclose(out_bf, ref, atol=1e-1, rtol=1e-1), float(
        jnp.max(jnp.abs(out_bf - ref)))

    print("KERNEL_OK")
</pallas_src>

<mosaic_0001>
module attributes {stable_mosaic.version = 11 : i64} {
  func.func @_linear_kernel(%arg0: i32, %arg1: i32, %arg2: i32, %arg3: memref<32x128xf32, #tpu.memory_space<vmem>>, %arg4: memref<128x128xf32, #tpu.memory_space<vmem>>, %arg5: memref<1x128xf32, #tpu.memory_space<vmem>>, %arg6: memref<32x128xf32, #tpu.memory_space<vmem>>, %arg7: memref<32x128xf32, #tpu.memory_space<vmem>>) attributes {dimension_semantics = [#tpu.dimension_semantics<parallel>, #tpu.dimension_semantics<parallel>, #tpu.dimension_semantics<arbitrary>], iteration_bounds = array<i64: 1, 3, 1>, scalar_prefetch = 0 : i64, scratch_operands = 1 : i64, tpu.core_type = #tpu.core_type<tc>, window_params = [{transform_indices = @transform_0, window_bounds = array<i64: 32, 128>}, {transform_indices = @transform_1, window_bounds = array<i64: 128, 128>}, {transform_indices = @transform_2, window_bounds = array<i64: 1, 128>}, {transform_indices = @transform_3, window_bounds = array<i64: 32, 128>}]} {
    %c0_i32 = arith.constant 0 : i32
    %0 = arith.cmpi eq, %arg2, %c0_i32 : i32
    %1 = arith.extui %0 : i1 to i32
    %c0_i32_0 = arith.constant 0 : i32
    %2 = arith.cmpi ne, %1, %c0_i32_0 : i32
    scf.if %2 {
      %cst_10 = arith.constant 0.000000e+00 : f32
      %12 = vector.broadcast %cst_10 : f32 to vector<32x128xf32>
      %c0_11 = arith.constant 0 : index
      %c0_12 = arith.constant 0 : index
      %13 = vector.load %arg7[%c0_11, %c0_12] : memref<32x128xf32, #tpu.memory_space<vmem>>, vector<32x128xf32>
      tpu.vector_store %arg7[%c0_11, %c0_12], %12 {strides = array<i32>} : memref<32x128xf32, #tpu.memory_space<vmem>>, vector<32x128xf32>,
    } else {
    }
    %c0 = arith.constant 0 : index
    %c0_1 = arith.constant 0 : index
    %3 = vector.load %arg7[%c0, %c0_1] : memref<32x128xf32, #tpu.memory_space<vmem>>, vector<32x128xf32>
    %c0_2 = arith.constant 0 : index
    %c0_3 = arith.constant 0 : index
    %4 = vector.load %arg3[%c0_2, %c0_3] : memref<32x128xf32, #tpu.memory_space<vmem>>, vector<32x128xf32>
    %c0_4 = arith.constant 0 : index
    %c0_5 = arith.constant 0 : index
    %5 = vector.load %arg4[%c0_4, %c0_5] : memref<128x128xf32, #tpu.memory_space<vmem>>, vector<128x128xf32>
    %cst = arith.constant dense<0.000000e+00> : vector<32x128xf32>
    %6 = tpu.matmul %4, %5, %cst {dimension_numbers = #tpu.dot_dimension_numbers<[1], [0], [0], [1], [0, 0, 1, 1], [], []>} : vector<32x128xf32>, vector<128x128xf32>, vector<32x128xf32> -> vector<32x128xf32>
    %7 = arith.addf %3, %6 : vector<32x128xf32>
    %c0_6 = arith.constant 0 : index
    %c0_7 = arith.constant 0 : index
    %8 = vector.load %arg7[%c0_6, %c0_7] : memref<32x128xf32, #tpu.memory_space<vmem>>, vector<32x128xf32>
    tpu.vector_store %arg7[%c0_6, %c0_7], %7 {strides = array<i32>} : memref<32x128xf32, #tpu.memory_space<vmem>>, vector<32x128xf32>,
    %c0_i32_8 = arith.constant 0 : i32
    %9 = arith.cmpi eq, %arg2, %c0_i32_8 : i32
    %10 = arith.extui %9 : i1 to i32
    %c0_i32_9 = arith.constant 0 : i32
    %11 = arith.cmpi ne, %10, %c0_i32_9 : i32
    scf.if %11 {
      %c0_10 = arith.constant 0 : index
      %c0_11 = arith.constant 0 : index
      %12 = vector.load %arg7[%c0_10, %c0_11] : memref<32x128xf32, #tpu.memory_space<vmem>>, vector<32x128xf32>
      %c0_12 = arith.constant 0 : index
      %c0_13 = arith.constant 0 : index
      %13 = vector.load %arg5[%c0_12, %c0_13] : memref<1x128xf32, #tpu.memory_space<vmem>>, vector<1x128xf32>
      %14 = vector.broadcast %13 : vector<1x128xf32> to vector<32x128xf32>
      %15 = arith.addf %12, %14 : vector<32x128xf32>
      %c0_14 = arith.constant 0 : index
      %c0_15 = arith.constant 0 : index
      %16 = vector.load %arg6[%c0_14, %c0_15] : memref<32x128xf32, #tpu.memory_space<vmem>>, vector<32x128xf32>
      tpu.vector_store %arg6[%c0_14, %c0_15], %15 {strides = array<i32>} : memref<32x128xf32, #tpu.memory_space<vmem>>, vector<32x128xf32>,
    } else {
    }
    return
  }
  func.func @transform_0(%arg0: i32, %arg1: i32, %arg2: i32) -> (i32, i32) {
    %c0_i32 = arith.constant 0 : i32
    return %arg0, %arg2 : i32, i32
  }
  func.func @transform_1(%arg0: i32, %arg1: i32, %arg2: i32) -> (i32, i32) {
    %c0_i32 = arith.constant 0 : i32
    return %arg2, %arg1 : i32, i32
  }
  func.func @transform_2(%arg0: i32, %arg1: i32, %arg2: i32) -> (i32, i32) {
    %c0_i32 = arith.constant 0 : i32
    %c0_i32_0 = arith.constant 0 : i32
    return %c0_i32, %arg1 : i32, i32
  }
  func.func @transform_3(%arg0: i32, %arg1: i32, %arg2: i32) -> (i32, i32) {
    %c0_i32 = arith.constant 0 : i32
    return %arg0, %arg1 : i32, i32
  }
}

</mosaic_0001>

<llo_original>
// kernel: tpu_custom_call.1
$region0: #{tpu_custom_call.1}
  #allocation0 [shape = 'u32[]', space=smem, size = 0x4, offset = 0x4, fixed_abs, tag = 'smem constant byte address 0x4 - core index']
  #allocation1 [shape = 'u32[144,128]{1,0:T(1,128)}', space=vmem, size = 0x12000, scoped, tag = 'internal scratch']
  #allocation2 [shape = 'f32[32,128]{1,0:T(8,128)}', space=vmem, size = 0x4000, scoped, tag = 'scratch operand']
  %s0 = inlined_call_operand.hbm [shape: f32[32,128], index: 0, kind: input, shape index: {}]
  %s1 = inlined_call_operand.hbm [shape: f32[128,384], index: 1, kind: input, shape index: {}]
  %s2 = inlined_call_operand.vmem [shape: f32[1,384], index: 2, kind: input, shape index: {}]
  %s3 = inlined_call_operand.hbm [shape: f32[32,384], index: 3, kind: output, shape index: {}]
  %s4 = sld [smem:[#allocation0]]
  $region61: #{tpu_custom_call.1} parent=0
    _
  %s6 = ssub.s32 1, %s4
  %s7 = scalar_select 0, %s6, %s4
  $region1: #{tpu_custom_call.1} parent=0
    #allocation3 [shape = 'u8[16384]{0}', space=vmem, size = 0x4000, scoped, tag = 'input window, operand 0, single buffered']
    #allocation4 [shape = 's32[2]{0}', space=sflag, size = 0x8, scoped, tag = 'scoped memory for tpu_custom_call.1']
    #allocation5 [shape = 's32[2]{0}', space=sflag, size = 0x8, scoped, tag = 'scoped memory for tpu_custom_call.1']
    #allocation6 [shape = 'u8[131072]{0}', space=vmem, size = 0x20000, scoped, tag = 'input window, operand 1']
    #allocation7 [shape = 's32[2]{0}', space=sflag, size = 0x8, scoped, tag = 'scoped memory for tpu_custom_call.1']
    #allocation8 [shape = 'u8[32768]{0}', space=vmem, size = 0x8000, scoped, tag = 'output window, operand 0']
    %8 = vsyncpa [#allocation4], 0
    %9 = vsyncpa [#allocation7], 0
    %s10 = scalar_lea.sflag [#allocation7], 1
    %11 = vsyncpa %s10, 0
    %12 = vsyncpa [#allocation5], 0
    %s13 = scalar_lea.sflag [#allocation5], 1
    %14 = vsyncpa %s13, 0
    loop: start=0, step=1, limit=5
    $region2: #{tpu_custom_call.1} parent=1 // loop_pre_header
      _
    $region3: #{tpu_custom_call.1} parent=1 // loop_header
      %s16 = sphi 0, %s20
      %p17 = scmp.ge.s32.totalorder %s16, 5
      %s23 = sphi 0, %s42
      %s24 = sphi 0, %s38
      %s25 = sphi 0, %s34
      %s26 = sphi 0, %s23
      %s27 = sphi 0, %s24
      %s28 = sphi 0, %s25
      %s29 = sphi 0, %s26
      %s30 = sphi 0, %s27
      %s31 = sphi 0, %s28
      %s47 = sphi 0, %s49
      %s50 = sphi 0, %s47
      %s51 = sphi 0, %s50
      %s67 = sphi 0, %s51
      %s75 = sphi 0, %s77
      %s78 = sphi 0, %s75
      %s79 = sphi 0, %s78
      %s95 = sphi 0, %s79
      %s101 = sphi 0, %s103
      %s104 = sphi 0, %s101
      %s105 = sphi 0, %s104
      %s121 = sphi 0, %s105
      %s129 = sphi 0, %s131
      %s132 = sphi 0, %s129
      %s133 = sphi 0, %s132
      %s149 = sphi 0, %s133
    $region4: #{tpu_custom_call.1} parent=1 // loop_header_branch
      %19 = sbr.rel (%p17) target = $region8
    $region5: #{tpu_custom_call.1} parent=1 // loop_body
      %s21 = ssub.s32 %s16, 1
      %s22 = ssub.s32 %s16, 2
      %s32 = sadd.s32 1, %s25
      %p33 = scmp.ge.s32.totalorder %s32, 1
      %s34 = scalar_select %p33, 0, %s32
      %s35 = sadd.s32 1, %s24
      %s36 = scalar_select %p33, %s35, %s24
      %p37 = scmp.ge.s32.totalorder %s36, 3
      %s38 = scalar_select %p37, 0, %s36
      %s39 = sadd.s32 1, %s23
      %s40 = scalar_select %p37, %s39, %s23
      %p41 = scmp.ge.s32.totalorder %s40, 1
      %s42 = scalar_select %p41, 0, %s40
      %s43 = ssub.s32 %s23, %s42
      %s44 = ssub.s32 %s25, %s34
      %s45 = sor.u32 %s43, %s44
      %p46 = scmp.eq.s32.totalorder %s45, 0
      %s48 = sadd.s32 %s47, 1
      %s49 = scalar_select %p46, %s47, %s48
      %p52 = pneg %p46
      %p53 = scmp.eq.s32.totalorder %s16, 2
      %p54 = por %p52, %p53
      %p55 = scmp.ne.s32.totalorder %s47, %s50
      %p56 = scmp.eq.s32.totalorder %s16, 0
      %p57 = por %p55, %p56
      %p58 = scmp.ne.s32.totalorder %s47, %s50
      %p59 = scmp.eq.s32.totalorder %s21, 2
      %p60 = por %p58, %p59
      %p61 = scmp.ne.s32.totalorder %s50, %s51
      %p62 = scmp.eq.s32.totalorder %s21, 0
      %p63 = por %p61, %p62
      %p64 = scmp.ne.s32.totalorder %s50, %s51
      %p65 = scmp.eq.s32.totalorder %s22, 2
      %p66 = por %p64, %p65
      %p68 = scmp.ne.s32.totalorder %s51, %s67
      %p69 = scmp.eq.s32.totalorder %s22, 0
      %p70 = por %p68, %p69
      %s71 = ssub.s32 %s25, %s34
      %s72 = ssub.s32 %s24, %s38
      %s73 = sor.u32 %s71, %s72
      %p74 = scmp.eq.s32.totalorder %s73, 0
      %s76 = sadd.s32 %s75, 1
      %s77 = scalar_select %p74, %s75, %s76
      %p80 = pneg %p74
      %p81 = scmp.eq.s32.totalorder %s16, 2
      %p82 = por %p80, %p81
      %p83 = scmp.ne.s32.totalorder %s75, %s78
      %p84 = scmp.eq.s32.totalorder %s16, 0
      %p85 = por %p83, %p84
      %p86 = scmp.ne.s32.totalorder %s75, %s78
      %p87 = scmp.eq.s32.totalorder %s21, 2
      %p88 = por %p86, %p87
      %p89 = scmp.ne.s32.totalorder %s78, %s79
      %p90 = scmp.eq.s32.totalorder %s21, 0
      %p91 = por %p89, %p90
      %p92 = scmp.ne.s32.totalorder %s78, %s79
      %p93 = scmp.eq.s32.totalorder %s22, 2
      %p94 = por %p92, %p93
      %p96 = scmp.ne.s32.totalorder %s79, %s95
      %p97 = scmp.eq.s32.totalorder %s22, 0
      %p98 = por %p96, %p97
      %s99 = ssub.s32 %s24, %s38
      %p100 = scmp.eq.s32.totalorder %s99, 0
      %s102 = sadd.s32 %s101, 1
      %s103 = scalar_select %p100, %s101, %s102
      %p106 = pneg %p100
      %p107 = scmp.eq.s32.totalorder %s16, 2
      %p108 = por %p106, %p107
      %p109 = scmp.ne.s32.totalorder %s101, %s104
      %p110 = scmp.eq.s32.totalorder %s16, 0
      %p111 = por %p109, %p110
      %p112 = scmp.ne.s32.totalorder %s101, %s104
      %p113 = scmp.eq.s32.totalorder %s21, 2
      %p114 = por %p112, %p113
      %p115 = scmp.ne.s32.totalorder %s104, %s105
      %p116 = scmp.eq.s32.totalorder %s21, 0
      %p117 = por %p115, %p116
      %p118 = scmp.ne.s32.totalorder %s104, %s105
      %p119 = scmp.eq.s32.totalorder %s22, 2
      %p120 = por %p118, %p119
      %p122 = scmp.ne.s32.totalorder %s105, %s121
      %p123 = scmp.eq.s32.totalorder %s22, 0
      %p124 = por %p122, %p123
      %s125 = ssub.s32 %s23, %s42
      %s126 = ssub.s32 %s24, %s38
      %s127 = sor.u32 %s125, %s126
      %p128 = scmp.eq.s32.totalorder %s127, 0
      %s130 = sadd.s32 %s129, 1
      %s131 = scalar_select %p128, %s129, %s130
      %p134 = pneg %p128
      %p135 = scmp.eq.s32.totalorder %s16, 2
      %p136 = por %p134, %p135
      %p137 = scmp.ne.s32.totalorder %s129, %s132
      %p138 = scmp.eq.s32.totalorder %s16, 0
      %p139 = por %p137, %p138
      %p140 = scmp.ne.s32.totalorder %s129, %s132
      %p141 = scmp.eq.s32.totalorder %s21, 2
      %p142 = por %p140, %p141
      %p143 = scmp.ne.s32.totalorder %s132, %s133
      %p144 = scmp.eq.s32.totalorder %s21, 0
      %p145 = por %p143, %p144
      %p146 = scmp.ne.s32.totalorder %s132, %s133
      %p147 = scmp.eq.s32.totalorder %s22, 2
      %p148 = por %p146, %p147
      %p150 = scmp.ne.s32.totalorder %s133, %s149
      %p151 = scmp.eq.s32.totalorder %s22, 0
      %p152 = por %p150, %p151
      %p153 = scmp.le.s32.totalorder 1, %s16
      %p154 = scmp.lt.s32.totalorder %s16, 4
      %p155 = pnand %p153, %p154
      %p156 = pneg %p155
      // Predicated region
      $region9: #{tpu_custom_call.1} parent=5 // pred_check
        _
      $region10: #{tpu_custom_call.1} parent=5 // pred_check_branch
        %158 = sbr.rel (%p155) target = $region12
      $region11: #{tpu_custom_call.1} parent=5 // pred_region
        %s159 = ssub.s32 %s16, 1
        // Predicated region
        $region13: #{tpu_custom_call.1} parent=11 // pred_check
          %p160 = pneg %p63
        $region14: #{tpu_custom_call.1} parent=11 // pred_check_branch
          %162 = sbr.rel (%p160) target = $region16
        $region15: #{tpu_custom_call.1} parent=11 // pred_region
          %s163 = smul.u32 4, %s26
          %s165 = ssub.s32 512, 512
          %166 = vsyncadd [#allocation4], %s165
          %s167 = sadd.s32 %s28, %s163
          %s168 = smul.addr %s167, 128
          %s169 = scalar_lea.hbm %s0, %s168
          %s170 = sshll.u32 [#allocation3], 4
          %s171 = int_to_ptr.vmem [resolvable:$true] %s170
          %176 = dma.hbm_to_vmem [thread:$0]  %s169, 512, %s171, [#allocation4], 128, 128, 8
        $region16: #{tpu_custom_call.1} parent=11 // pred_fallthru
          _
      $region12: #{tpu_custom_call.1} parent=5 // pred_fallthru
        _
      %p177 = scmp.lt.s32.totalorder %s16, 3
      // Predicated region
      $region17: #{tpu_custom_call.1} parent=5 // pred_check
        %p178 = pneg %p177
      $region18: #{tpu_custom_call.1} parent=5 // pred_check_branch
        %180 = sbr.rel (%p178) target = $region20
      $region19: #{tpu_custom_call.1} parent=5 // pred_region
        // Predicated region
        $region21: #{tpu_custom_call.1} parent=19 // pred_check
          %p181 = pneg %p85
        $region22: #{tpu_custom_call.1} parent=19 // pred_check_branch
          %183 = sbr.rel (%p181) target = $region24
        $region23: #{tpu_custom_call.1} parent=19 // pred_region
          %s184 = sand.u32 %s75, 1
          %s185 = scalar_lea.sflag [#allocation7], %s184
          %s186 = sand.u32 %s75, 1
          %s187 = smul.addr %s186, 128
          %s188 = scalar_lea.vmem [#allocation6], %s187
          %s189 = smul.u32 16, %s25
          %s191 = ssub.s32 2048, 2048
          %192 = vsyncadd %s185, %s191
          %s193 = smul.addr %s189, 3
          %s194 = sadd.s32 %s24, %s193
          %s195 = smul.addr %s194, 128
          %s196 = scalar_lea.hbm %s1, %s195
          %s197 = sshll.u32 %s188, 4
          %s198 = int_to_ptr.vmem [resolvable:$true] %s197
          %203 = dma.hbm_to_vmem [thread:$0]  %s196, 2048, %s198, %s185, 384, 128, 8
        $region24: #{tpu_custom_call.1} parent=19 // pred_fallthru
          _
        // Predicated region
        $region25: #{tpu_custom_call.1} parent=19 // pred_check
          %p204 = pneg %p111
        $region26: #{tpu_custom_call.1} parent=19 // pred_check_branch
          %206 = sbr.rel (%p204) target = $region28
        $region27: #{tpu_custom_call.1} parent=19 // pred_region
          %p207 = scmp.lt.s32.totalorder %s24, 2
          %s208 = scalar_select %p207, %s24, 2
          %s209 = scalar_lea.vmem %s2, %s208
        $region28: #{tpu_custom_call.1} parent=19 // pred_fallthru
          _
      $region20: #{tpu_custom_call.1} parent=5 // pred_fallthru
        _
      %p210 = scmp.le.s32.totalorder 1, %s16
      %p211 = scmp.lt.s32.totalorder %s16, 4
      %p212 = pnand %p210, %p211
      %p213 = pneg %p212
      // Predicated region
      $region29: #{tpu_custom_call.1} parent=5 // pred_check
        _
      $region30: #{tpu_custom_call.1} parent=5 // pred_check_branch
        %215 = sbr.rel (%p212) target = $region32
      $region31: #{tpu_custom_call.1} parent=5 // pred_region
        %s216 = ssub.s32 %s16, 1
        // Predicated region
        $region33: #{tpu_custom_call.1} parent=31 // pred_check
          %p217 = pneg %p63
        $region34: #{tpu_custom_call.1} parent=31 // pred_check_branch
          %219 = sbr.rel (%p217) target = $region36
        $region35: #{tpu_custom_call.1} parent=31 // pred_region
          %220 = dma.done [#allocation4], 512
        $region36: #{tpu_custom_call.1} parent=31 // pred_fallthru
          _
        %s221 = sand.u32 %s78, 1
        %s222 = scalar_lea.sflag [#allocation7], %s221
        %s223 = sand.u32 %s78, 1
        %s224 = smul.addr %s223, 128
        %s225 = scalar_lea.vmem [#allocation6], %s224
        // Predicated region
        $region37: #{tpu_custom_call.1} parent=31 // pred_check
          %p226 = pneg %p91
        $region38: #{tpu_custom_call.1} parent=31 // pred_check_branch
          %228 = sbr.rel (%p226) target = $region40
        $region39: #{tpu_custom_call.1} parent=31 // pred_region
          %229 = dma.done %s222, 2048
        $region40: #{tpu_custom_call.1} parent=31 // pred_fallthru
          _
        %p230 = pneg %p63
        %p231 = pneg %p60
        %s232 = sand.u32 %s78, 1
        %s233 = scalar_lea.sflag [#allocation7], %s232
        %s234 = sand.u32 %s78, 1
        %s235 = smul.addr %s234, 128
        %s236 = scalar_lea.vmem [#allocation6], %s235
        %p237 = pneg %p91
        %p238 = pneg %p88
        %p239 = scmp.lt.s32.totalorder %s27, 2
        %s240 = scalar_select %p239, %s27, 2
        %s241 = scalar_lea.vmem %s2, %s240
        %p242 = pneg %p117
        %p243 = pneg %p114
        %p244 = pneg %p145
        %p245 = pneg %p142
        %s246 = sand.u32 %s132, 1
        %s247 = scalar_lea.sflag [#allocation5], %s246
        %s248 = sand.u32 %s132, 1
        %s249 = smul.addr %s248, 32
        %s250 = scalar_lea.vmem [#allocation8], %s249
        %s251 = smul.u32 4, %s26
        %s252 = smul.u32 16, %s28
        %p253 = scmp.lt.s32.totalorder %s27, 2
        %s254 = scalar_select %p253, %s27, 2
        %s255 = scalar_lea.vmem %s2, %s254
        %s256 = smul.u32 4, %s26
        %p257 = scmp.eq.s32.totalorder %s28, 0
        // Predicated region
        $region41: #{tpu_custom_call.1} parent=31 // pred_check
          %p258 = pneg %p257
        $region42: #{tpu_custom_call.1} parent=31 // pred_check_branch
          %260 = sbr.rel (%p258) target = $region44
        $region43: #{tpu_custom_call.1} parent=31 // pred_region
          %261 = vst [vmem:[#allocation2] sm:$0xff] 0.0
          %262 = vst [vmem:[#allocation2 + $0x8] sm:$0xff] 0.0
          %263 = vst [vmem:[#allocation2 + $0x10] sm:$0xff] 0.0
          %264 = vst [vmem:[#allocation2 + $0x18] sm:$0xff] 0.0
        $region44: #{tpu_custom_call.1} parent=31 // pred_fallthru
          _
        %v265 = vld [vmem:[#allocation2] sm:$0xff]
        %v266 = vld [vmem:[#allocation2 + $0x8] sm:$0xff]
        %v267 = vld [vmem:[#allocation2 + $0x10] sm:$0xff]
        %v268 = vld [vmem:[#allocation2 + $0x18] sm:$0xff]
        %v269 = vld [vmem:[#allocation3] sm:$0xff]
        %v270 = vld [vmem:[#allocation3 + $0x8] sm:$0xff]
        %v271 = vld [vmem:[#allocation3 + $0x10] sm:$0xff]
        %v272 = vld [vmem:[#allocation3 + $0x18] sm:$0xff]
        %v273 = vld [vmem:[%s225] sm:$0xff]
        %v274 = vld [vmem:[%s225 + $0x8] sm:$0xff]
        %v275 = vld [vmem:[%s225 + $0x10] sm:$0xff]
        %v276 = vld [vmem:[%s225 + $0x18] sm:$0xff]
        %v277 = vld [vmem:[%s225 + $0x20] sm:$0xff]
        %v278 = vld [vmem:[%s225 + $0x28] sm:$0xff]
        %v279 = vld [vmem:[%s225 + $0x30] sm:$0xff]
        %v280 = vld [vmem:[%s225 + $0x38] sm:$0xff]
        %v281 = vld [vmem:[%s225 + $0x40] sm:$0xff]
        %v282 = vld [vmem:[%s225 + $0x48] sm:$0xff]
        %v283 = vld [vmem:[%s225 + $0x50] sm:$0xff]
        %v284 = vld [vmem:[%s225 + $0x58] sm:$0xff]
        %v285 = vld [vmem:[%s225 + $0x60] sm:$0xff]
        %v286 = vld [vmem:[%s225 + $0x68] sm:$0xff]
        %v287 = vld [vmem:[%s225 + $0x70] sm:$0xff]
        %v288 = vld [vmem:[%s225 + $0x78] sm:$0xff]
        %289 = vmatprep.subr.mxu0 0.0
        %290 = vmatpush1.msra.mxu0 %v288
        %291 = vmatprep.subr.mxu0 0.0
        %292 = vmatpush1.msra.mxu0 %v287
        %293 = vmatprep.subr.mxu0 0.0
        %294 = vmatpush1.msra.mxu0 %v286
        %295 = vmatprep.subr.mxu0 0.0
        %296 = vmatpush1.msra.mxu0 %v285
        %297 = vmatprep.subr.mxu0 0.0
        %298 = vmatpush1.msra.mxu0 %v284
        %299 = vmatprep.subr.mxu0 0.0
        %300 = vmatpush1.msra.mxu0 %v283
        %301 = vmatprep.subr.mxu0 0.0
        %302 = vmatpush1.msra.mxu0 %v282
        %303 = vmatprep.subr.mxu0 0.0
        %304 = vmatpush1.msra.mxu0 %v281
        %305 = vmatprep.subr.mxu0 0.0
        %306 = vmatpush1.msra.mxu0 %v280
        %307 = vmatprep.subr.mxu0 0.0
        %308 = vmatpush1.msra.mxu0 %v279
        %309 = vmatprep.subr.mxu0 0.0
        %310 = vmatpush1.msra.mxu0 %v278
        %311 = vmatprep.subr.mxu0 0.0
        %312 = vmatpush1.msra.mxu0 %v277
        %313 = vmatprep.subr.mxu0 0.0
        %314 = vmatpush1.msra.mxu0 %v276
        %315 = vmatprep.subr.mxu0 0.0
        %316 = vmatpush1.msra.mxu0 %v275
        %317 = vmatprep.subr.mxu0 0.0
        %318 = vmatpush1.msra.mxu0 %v274
        %319 = vmatprep.subr.mxu0 0.0
        %320 = vmatpush1.msra.mxu0 %v273
        %321 = vmatprep.subr.mxu0 0.0
        %322 = vmatpush2.msra.mxu0 0.0
        %323 = vmatprep.subr.mxu0 0.0
        %324 = vmatpush2.msra.mxu0 0.0
        %325 = vmatprep.subr.mxu0 0.0
        %326 = vmatpush2.msra.mxu0 0.0
        %327 = vmatprep.subr.mxu0 0.0
        %328 = vmatpush2.msra.mxu0 0.0
        %329 = vmatprep.subr.mxu0 0.0
        %330 = vmatpush2.msra.mxu0 0.0
        %331 = vmatprep.subr.mxu0 0.0
        %332 = vmatpush2.msra.mxu0 0.0
        %333 = vmatprep.subr.mxu0 0.0
        %334 = vmatpush2.msra.mxu0 0.0
        %335 = vmatprep.subr.mxu0 0.0
        %336 = vmatpush2.msra.mxu0 0.0
        %337 = vmatprep.subr.mxu0 0.0
        %338 = vmatpush2.msra.mxu0 0.0
        %339 = vmatprep.subr.mxu0 0.0
        %340 = vmatpush2.msra.mxu0 0.0
        %341 = vmatprep.subr.mxu0 0.0
        %342 = vmatpush2.msra.mxu0 0.0
        %343 = vmatprep.subr.mxu0 0.0
        %344 = vmatpush2.msra.mxu0 0.0
        %345 = vmatprep.subr.mxu0 0.0
        %346 = vmatpush2.msra.mxu0 0.0
        %347 = vmatprep.subr.mxu0 0.0
        %348 = vmatpush2.msra.mxu0 0.0
        %349 = vmatprep.subr.mxu0 0.0
        %350 = vmatpush2.msra.mxu0 0.0
        %351 = vmatprep.subr.mxu0 0.0
        %352 = vmatpush2.msra.mxu0 0.0
        %353 = vmatprep.mubr.f32.mxu0 0.0
        %354 = vmatmul.mubr.f32.gmra.mxu0 %v269
        %v355 = vpop.f32.mrf.mxu0
        %v356 = vadd.f32 0.0, %v355
        %v357 = vpop.f32.mrf.mxu0
        %358 = vmatprep.mubr.f32.mxu0 0.0
        %359 = vmatmul.mubr.f32.gmra.mxu0 %v270
        %v360 = vpop.f32.mrf.mxu0
        %v361 = vadd.f32 0.0, %v360
        %v362 = vpop.f32.mrf.mxu0
        %363 = vmatprep.mubr.f32.mxu0 0.0
        %364 = vmatmul.mubr.f32.gmra.mxu0 %v271
        %v365 = vpop.f32.mrf.mxu0
        %v366 = vadd.f32 0.0, %v365
        %v367 = vpop.f32.mrf.mxu0
        %368 = vmatprep.mubr.f32.mxu0 0.0
        %369 = vmatmul.mubr.f32.gmra.mxu0 %v272
        %v370 = vpop.f32.mrf.mxu0
        %v371 = vadd.f32 0.0, %v370
        %v372 = vpop.f32.mrf.mxu0
        %373 = vdwg.mxu0
        %v374 = vadd.f32 %v265, %v356
        %v375 = vadd.f32 %v266, %v361
        %v376 = vadd.f32 %v267, %v366
        %v377 = vadd.f32 %v268, %v371
        %378 = vst [vmem:[#allocation2] sm:$0xff] %v374
        %379 = vst [vmem:[#allocation2 + $0x8] sm:$0xff] %v375
        %380 = vst [vmem:[#allocation2 + $0x10] sm:$0xff] %v376
        %381 = vst [vmem:[#allocation2 + $0x18] sm:$0xff] %v377
        // Predicated region
        $region45: #{tpu_custom_call.1} parent=31 // pred_check
          %p382 = pneg %p257
        $region46: #{tpu_custom_call.1} parent=31 // pred_check_branch
          %384 = sbr.rel (%p382) target = $region48
        $region47: #{tpu_custom_call.1} parent=31 // pred_region
          %v385 = vld [vmem:[#allocation2] sm:$0xff]
          %v386 = vld [vmem:[#allocation2 + $0x8] sm:$0xff]
          %v387 = vld [vmem:[#allocation2 + $0x10] sm:$0xff]
          %v388 = vld [vmem:[#allocation2 + $0x18] sm:$0xff]
          %v389 = vld [vmem:[%s255] sm:$0x1]
          %v391 = vlaneseq
          %v392 = vshrl.u32 %v391, 7
          %v393 = vsub.s32 0, %v392
          %v394 = vrot.slane %v389, %v393
          %v396 = vadd.f32 %v385, %v394
          %v397 = vadd.f32 %v386, %v394
          %v398 = vadd.f32 %v387, %v394
          %v399 = vadd.f32 %v388, %v394
          %400 = vst [vmem:[%s250] sm:$0xff] %v396
          %401 = vst [vmem:[%s250 + $0x8] sm:$0xff] %v397
          %402 = vst [vmem:[%s250 + $0x10] sm:$0xff] %v398
          %403 = vst [vmem:[%s250 + $0x18] sm:$0xff] %v399
        $region48: #{tpu_custom_call.1} parent=31 // pred_fallthru
          _
        %s404 = sand.u32 %s132, 1
        %s405 = scalar_lea.sflag [#allocation5], %s404
        %s406 = sand.u32 %s132, 1
        %s407 = smul.addr %s406, 32
        %s408 = scalar_lea.vmem [#allocation8], %s407
        // Predicated region
        $region49: #{tpu_custom_call.1} parent=31 // pred_check
          %p409 = pneg %p142
        $region50: #{tpu_custom_call.1} parent=31 // pred_check_branch
          %411 = sbr.rel (%p409) target = $region52
        $region51: #{tpu_custom_call.1} parent=31 // pred_region
          %s412 = smul.u32 4, %s26
          %s414 = ssub.s32 512, 512
          %415 = vsyncadd %s405, %s414
          %s416 = smul.addr %s412, 3
          %s417 = sadd.s32 %s27, %s416
          %s418 = smul.addr %s417, 128
          %s419 = scalar_lea.hbm %s3, %s418
          %s420 = sshll.u32 %s408, 4
          %s421 = int_to_ptr.vmem [resolvable:$true] %s420
          %426 = dma.vmem_to_hbm [thread:$0]  %s421, 512, %s419, %s405, 128, 384, 8
        $region52: #{tpu_custom_call.1} parent=31 // pred_fallthru
          _
      $region32: #{tpu_custom_call.1} parent=5 // pred_fallthru
        _
      %p427 = scmp.le.s32.totalorder 2, %s16
      // Predicated region
      $region53: #{tpu_custom_call.1} parent=5 // pred_check
        %p428 = pneg %p427
      $region54: #{tpu_custom_call.1} parent=5 // pred_check_branch
        %430 = sbr.rel (%p428) target = $region56
      $region55: #{tpu_custom_call.1} parent=5 // pred_region
        %s431 = ssub.s32 %s16, 2
        // Predicated region
        $region57: #{tpu_custom_call.1} parent=55 // pred_check
          %p432 = pneg %p148
        $region58: #{tpu_custom_call.1} parent=55 // pred_check_branch
          %434 = sbr.rel (%p432) target = $region60
        $region59: #{tpu_custom_call.1} parent=55 // pred_region
          %s435 = sand.u32 %s133, 1
          %s436 = scalar_lea.sflag [#allocation5], %s435
          %s437 = sand.u32 %s133, 1
          %s438 = smul.addr %s437, 32
          %s439 = scalar_lea.vmem [#allocation8], %s438
          %440 = dma.done %s436, 512
        $region60: #{tpu_custom_call.1} parent=55 // pred_fallthru
          _
      $region56: #{tpu_custom_call.1} parent=5 // pred_fallthru
        _
    $region6: #{tpu_custom_call.1} parent=1 // loop_footer
      %s20 = sadd.s32 1, %s16
    $region7: #{tpu_custom_call.1} parent=1 // loop_footer_branch
      %15 = sbr.rel target = $region3
    $region8: #{tpu_custom_call.1} parent=1 // loop_exit
      _
    %441 = vsyncpa [#allocation4], 1
    %s442 = scalar_lea.sflag [#allocation4], 1
    %443 = vsyncpa %s442, 1
    %444 = vsyncpa [#allocation7], 1
    %s445 = scalar_lea.sflag [#allocation7], 1
    %446 = vsyncpa %s445, 1
    %447 = vsyncpa [#allocation5], 1
    %s448 = scalar_lea.sflag [#allocation5], 1
    %449 = vsyncpa %s448, 1

</llo_original>
